<compile_context>
chip_gen: v6e
topology: v6e:2x2x1
jax: 0.10.0
libtpu: 0.0.40
codegen_flags: <defaults>
</compile_context>

<pallas_src>
import functools

import jax
import jax.numpy as jnp
from jax import lax
from jax.experimental import pallas as pl
from jax.experimental.pallas import tpu as pltpu


def _round_up(x, m):
    return (x + m - 1) // m * m


_VMEM_LIMIT = 48 * 1024 * 1024  # <= ~48 MiB: headroom on v7x (64 MiB physical), fine on v5e/v6e.
_MAX_TM = 512
_MAX_TN = 1024
_MAX_TK_FULL = 2048             # collapse K axis (tk = full padded H) when Hp <= this
_TK_TILED = 512                 # K tile when H is too large to collapse


# ---------------------------------------------------------------------------
# Kernel helpers
# ---------------------------------------------------------------------------
def _loss_partial(logits, y_raw, i, j, n_rows, n_cols):
    # Masked partial sum of  y*log_sigmoid(x) + (1-y)*log_sigmoid(-x)  for one tile,
    # using the identity  == log_sigmoid(x) - (1-y)*x  (one transcendental per element).
    y = y_raw.astype(jnp.float32)
    per_elem = jax.nn.log_sigmoid(logits) - (1.0 - y) * logits
    tm, tn = per_elem.shape
    row_ids = i * tm + lax.broadcasted_iota(jnp.int32, (tm, tn), 0)
    col_ids = j * tn + lax.broadcasted_iota(jnp.int32, (tm, tn), 1)
    per_elem = jnp.where((row_ids < n_rows) & (col_ids < n_cols), per_elem, 0.0)
    return jnp.sum(per_elem)


def _store_partial(part_ref, s):
    # Write the scalar partial sum into element [0,0] of this block's (8,128) slab tile;
    # the rest is zero, so a plain jnp.sum of the slab in the wrapper recovers the total.
    r0 = lax.broadcasted_iota(jnp.int32, (8, 128), 0) == 0
    c0 = lax.broadcasted_iota(jnp.int32, (8, 128), 1) == 0
    part_ref[...] = jnp.where(r0 & c0, s, jnp.float32(0.0))


# ---------------------------------------------------------------------------
# Kernels: 2-D grid (K collapsed, tk == padded H)
# ---------------------------------------------------------------------------
def _linear2d_kernel(x_ref, w_ref, b_ref, o_ref):
    # x: [tm, Hp] bf16, w: [Hp, tn] bf16, b: [1, tn] f32, o: [tm, tn] f32 (written once).
    o_ref[...] = jnp.dot(x_ref[...], w_ref[...],
                         preferred_element_type=jnp.float32) + b_ref[...]


def _linear2d_loss_kernel(x_ref, w_ref, b_ref, y_ref, o_ref, part_ref, *, n_rows, n_cols):
    i = pl.program_id(0)
    j = pl.program_id(1)
    logits = jnp.dot(x_ref[...], w_ref[...],
                     preferred_element_type=jnp.float32) + b_ref[...]
    o_ref[...] = logits
    _store_partial(part_ref, _loss_partial(logits, y_ref[...], i, j, n_rows, n_cols))


# ---------------------------------------------------------------------------
# Kernels: 3-D grid (K tiled) for large hidden sizes
# ---------------------------------------------------------------------------
def _linear3d_kernel(x_ref, w_ref, b_ref, o_ref):
    k = pl.program_id(2)

    @pl.when(k == 0)
    def _():
        # Initialize the resident f32 accumulator with the bias (no last-k bias re-pass).
        o_ref[...] = jnp.broadcast_to(b_ref[...], o_ref.shape)

    o_ref[...] += jnp.dot(x_ref[...], w_ref[...], preferred_element_type=jnp.float32)


def _linear3d_loss_kernel(x_ref, w_ref, b_ref, y_ref, o_ref, part_ref, *, n_rows, n_cols):
    i = pl.program_id(0)
    j = pl.program_id(1)
    k = pl.program_id(2)

    @pl.when(k == 0)
    def _():
        o_ref[...] = jnp.broadcast_to(b_ref[...], o_ref.shape)

    o_ref[...] += jnp.dot(x_ref[...], w_ref[...], preferred_element_type=jnp.float32)

    @pl.when(k == pl.num_programs(2) - 1)
    def _():
        _store_partial(part_ref,
                       _loss_partial(o_ref[...], y_ref[...], i, j, n_rows, n_cols))


# ---------------------------------------------------------------------------
# Parameter preparation (hoisted out of the per-call path)
# ---------------------------------------------------------------------------
def _plan_hidden(H):
    Hp128 = _round_up(H, 128)
    if Hp128 <= _MAX_TK_FULL:
        return Hp128, Hp128          # tk == Hp -> 2-D grid (K collapsed)
    return _TK_TILED, _round_up(H, _TK_TILED)


def _plan_cols(L):
    tn = min(_MAX_TN, _round_up(L, 128))
    return tn, _round_up(L, tn)


def prepare_params(weight_t, bias, *, compute_dtype=jnp.bfloat16):
    """Pad + cast classifier parameters once; reuse the result across forward calls."""
    H, L = weight_t.shape
    tk, Hp = _plan_hidden(H)
    tn, Lp = _plan_cols(L)
    w = jnp.pad(weight_t.astype(compute_dtype), ((0, Hp - H), (0, Lp - L)))
    b = jnp.pad(bias.astype(jnp.float32), (0, Lp - L)).reshape(1, Lp)
    return {"w": w, "b": b, "H": H, "L": L, "Hp": Hp, "Lp": Lp,
            "tk": tk, "tn": tn, "dtype": compute_dtype}


# ---------------------------------------------------------------------------
# Forward (glue in plain JAX)
# ---------------------------------------------------------------------------
def img_for_sememe_prediction(input_ids, params, labels=None):
    """
    input_ids: [B, H] float32
    params   : output of prepare_params(weight_t [H, L], bias [L])
    labels   : optional [B, L] float32 multi-hot
    Returns (loss, logits, indices) if labels given, else (logits, indices).
    """
    B, H = input_ids.shape
    assert H == params["H"]
    L, Lp, Hp = params["L"], params["Lp"], params["Hp"]
    tk, tn = params["tk"], params["tn"]
    dtype = params["dtype"]

    tm = min(_MAX_TM, _round_up(B, 8))
    Bp = _round_up(B, tm)

    x = jnp.pad(input_ids.astype(dtype), ((0, Bp - B), (0, Hp - H)))
    w, b = params["w"], params["b"]

    gi, gj, gk = Bp // tm, Lp // tn, Hp // tk

    if gk == 1:
        # 2-D grid: full hidden dim in one block, no accumulator revisits.
        grid = (gi, gj)
        x_spec = pl.BlockSpec((tm, tk), lambda i, j: (i, 0))
        w_spec = pl.BlockSpec((tk, tn), lambda i, j: (0, j))
        b_spec = pl.BlockSpec((1, tn), lambda i, j: (0, j))
        o_spec = pl.BlockSpec((tm, tn), lambda i, j: (i, j))
        y_spec = pl.BlockSpec((tm, tn), lambda i, j: (i, j))
        p_spec = pl.BlockSpec((8, 128), lambda i, j: (i, j))
        dims = ("parallel", "parallel")
        plain_kernel, loss_kernel = _linear2d_kernel, _linear2d_loss_kernel
    else:
        # 3-D grid: K innermost ("arbitrary"); o/partial blocks revisited only across k.
        grid = (gi, gj, gk)
        x_spec = pl.BlockSpec((tm, tk), lambda i, j, k: (i, k))
        w_spec = pl.BlockSpec((tk, tn), lambda i, j, k: (k, j))
        b_spec = pl.BlockSpec((1, tn), lambda i, j, k: (0, j))
        o_spec = pl.BlockSpec((tm, tn), lambda i, j, k: (i, j))
        y_spec = pl.BlockSpec((tm, tn), lambda i, j, k: (i, j))
        p_spec = pl.BlockSpec((8, 128), lambda i, j, k: (i, j))
        dims = ("parallel", "parallel", "arbitrary")
        plain_kernel, loss_kernel = _linear3d_kernel, _linear3d_loss_kernel

    cp = pltpu.CompilerParams(dimension_semantics=dims, vmem_limit_bytes=_VMEM_LIMIT)

    if labels is None:
        logits_p = pl.pallas_call(
            plain_kernel,
            out_shape=jax.ShapeDtypeStruct((Bp, Lp), jnp.float32),
            grid_spec=pltpu.PrefetchScalarGridSpec(
                num_scalar_prefetch=0, grid=grid,
                in_specs=[x_spec, w_spec, b_spec],
                out_specs=o_spec),
            compiler_params=cp,
        )(x, w, b)
        logits = logits_p[:B, :L]
        # TODO(synk): torch.sort (full descending argsort) has no clean Pallas TPU
        # primitive; done in plain JAX. Use jax.lax.top_k if only top-k sememes are needed.
        indices = jnp.argsort(logits, axis=-1, descending=True).astype(jnp.int32)
        return logits, indices

    # bf16 labels are exact for 0/1 multi-hot and halve the B*L label HBM read.
    y = jnp.pad(labels.astype(jnp.bfloat16), ((0, Bp - B), (0, Lp - L)))
    kernel = functools.partial(loss_kernel, n_rows=B, n_cols=L)
    logits_p, partials = pl.pallas_call(
        kernel,
        out_shape=(
            jax.ShapeDtypeStruct((Bp, Lp), jnp.float32),
            jax.ShapeDtypeStruct((gi * 8, gj * 128), jnp.float32),  # per-(i,j) partial sums
        ),
        grid_spec=pltpu.PrefetchScalarGridSpec(
            num_scalar_prefetch=0, grid=grid,
            in_specs=[x_spec, w_spec, b_spec, y_spec],
            out_specs=(o_spec, p_spec)),
        compiler_params=cp,
    )(x, w, b, y)

    logits = logits_p[:B, :L]
    # TODO(synk): torch.sort has no clean Pallas TPU primitive; argsort done in plain JAX.
    indices = jnp.argsort(logits, axis=-1, descending=True).astype(jnp.int32)
    loss = -jnp.sum(partials) / (B * L)   # mean over batch of (-1/L * per-sample sum)
    return loss, logits, indices


# ---------------------------------------------------------------------------
# Demo / smoke test
# ---------------------------------------------------------------------------
if __name__ == "__main__":
    def reference(x, wt, b, y=None):
        # Reference uses the same bf16-cast matmul inputs as the kernel.
        xr = x.astype(jnp.bfloat16).astype(jnp.float32)
        wr = wt.astype(jnp.bfloat16).astype(jnp.float32)
        lg = xr @ wr + b
        if y is None:
            return lg
        per = y * jax.nn.log_sigmoid(lg) + (1.0 - y) * jax.nn.log_sigmoid(-lg)
        ls = jnp.mean(-jnp.sum(per, axis=1) / lg.shape[1])
        return ls, lg

    key = jax.random.PRNGKey(0)

    # ---- Test 1: small shapes (single-block, K-collapsed 2-D grid) ---------
    B, H, L = 8, 32, 64
    k_x, k_w, k_b, k_y = jax.random.split(key, 4)
    input_ids = jax.random.normal(k_x, (B, H), dtype=jnp.float32)
    weight_t = jax.random.normal(k_w, (H, L), dtype=jnp.float32) / jnp.sqrt(H)
    bias = jax.random.normal(k_b, (L,), dtype=jnp.float32) * 0.01
    labels = (jax.random.uniform(k_y, (B, L)) < 0.3).astype(jnp.float32)

    params = prepare_params(weight_t, bias)
    loss, logits, indices = img_for_sememe_prediction(input_ids, params, labels)
    logits2, indices2 = img_for_sememe_prediction(input_ids, params, None)
    jax.block_until_ready((loss, logits, indices, logits2, indices2))

    ref_loss, ref_logits = reference(input_ids, weight_t, bias, labels)
    assert logits.shape == (B, L) and indices.shape == (B, L)
    assert jnp.allclose(logits, ref_logits, atol=1e-3, rtol=1e-3)
    assert jnp.allclose(logits2, ref_logits, atol=1e-3, rtol=1e-3)
    assert jnp.allclose(loss, ref_loss, atol=1e-4, rtol=1e-4)
    top = jnp.take_along_axis(logits, indices[:, :1], axis=1)[:, 0]
    assert jnp.allclose(top, logits.max(axis=1))

    # ---- Test 2: 3-D K-tiled grid, multi-tile, row/col padding & masking ---
    B2, H2, L2 = 300, 2560, 1200   # tk=512 (grid k=5), tn=1024 -> Lp=2048 (grid j=2)
    k_x, k_w, k_b, k_y = jax.random.split(jax.random.PRNGKey(1), 4)
    x2 = jax.random.normal(k_x, (B2, H2), dtype=jnp.float32)
    w2 = jax.random.normal(k_w, (H2, L2), dtype=jnp.float32) / jnp.sqrt(H2)
    b2 = jax.random.normal(k_b, (L2,), dtype=jnp.float32) * 0.01
    y2 = (jax.random.uniform(k_y, (B2, L2)) < 0.2).astype(jnp.float32)

    params2 = prepare_params(w2, b2)
    loss_2, logits_2, indices_2 = img_for_sememe_prediction(x2, params2, y2)
    jax.block_until_ready((loss_2, logits_2, indices_2))

    ref_loss_2, ref_logits_2 = reference(x2, w2, b2, y2)
    assert logits_2.shape == (B2, L2) and indices_2.shape == (B2, L2)
    assert jnp.allclose(logits_2, ref_logits_2, atol=2e-3, rtol=2e-3)
    assert jnp.allclose(loss_2, ref_loss_2, atol=1e-3, rtol=1e-3)

    # ---- Test 3: multi-block K-collapsed 2-D grid with row/col padding -----
    B3, H3, L3 = 600, 1280, 1100   # tk=Hp=1280 (2-D grid), tm=512 -> Bp=1024 (grid 2x2)
    k_x, k_w, k_b, k_y = jax.random.split(jax.random.PRNGKey(2), 4)
    x3 = jax.random.normal(k_x, (B3, H3), dtype=jnp.float32)
    w3 = jax.random.normal(k_w, (H3, L3), dtype=jnp.float32) / jnp.sqrt(H3)
    b3 = jax.random.normal(k_b, (L3,), dtype=jnp.float32) * 0.01
    y3 = (jax.random.uniform(k_y, (B3, L3)) < 0.2).astype(jnp.float32)

    params3 = prepare_params(w3, b3)
    loss_3, logits_3, indices_3 = img_for_sememe_prediction(x3, params3, y3)
    jax.block_until_ready((loss_3, logits_3, indices_3))

    ref_loss_3, ref_logits_3 = reference(x3, w3, b3, y3)
    assert logits_3.shape == (B3, L3) and indices_3.shape == (B3, L3)
    assert jnp.allclose(logits_3, ref_logits_3, atol=2e-3, rtol=2e-3)
    assert jnp.allclose(loss_3, ref_loss_3, atol=1e-3, rtol=1e-3)

    print("KERNEL_OK")
</pallas_src>

<mosaic_0001>
module attributes {stable_mosaic.version = 11 : i64} {
  func.func @_linear2d_loss_kernel(%arg0: i32, %arg1: i32, %arg2: memref<8x128xbf16, #tpu.memory_space<vmem>>, %arg3: memref<128x128xbf16, #tpu.memory_space<vmem>>, %arg4: memref<1x128xf32, #tpu.memory_space<vmem>>, %arg5: memref<8x128xbf16, #tpu.memory_space<vmem>>, %arg6: memref<8x128xf32, #tpu.memory_space<vmem>>, %arg7: memref<8x128xf32, #tpu.memory_space<vmem>>) attributes {dimension_semantics = [#tpu.dimension_semantics<parallel>, #tpu.dimension_semantics<parallel>], iteration_bounds = array<i64: 1, 1>, scalar_prefetch = 0 : i64, scratch_operands = 0 : i64, tpu.core_type = #tpu.core_type<tc>, window_params = [{transform_indices = @transform_0, window_bounds = array<i64: 8, 128>}, {transform_indices = @transform_1, window_bounds = array<i64: 128, 128>}, {transform_indices = @transform_2, window_bounds = array<i64: 1, 128>}, {transform_indices = @transform_3, window_bounds = array<i64: 8, 128>}, {transform_indices = @transform_4, window_bounds = array<i64: 8, 128>}, {transform_indices = @transform_5, window_bounds = array<i64: 8, 128>}]} {
    %c0 = arith.constant 0 : index
    %c0_0 = arith.constant 0 : index
    %0 = vector.load %arg2[%c0, %c0_0] : memref<8x128xbf16, #tpu.memory_space<vmem>>, vector<8x128xbf16>
    %c0_1 = arith.constant 0 : index
    %c0_2 = arith.constant 0 : index
    %1 = vector.load %arg3[%c0_1, %c0_2] : memref<128x128xbf16, #tpu.memory_space<vmem>>, vector<128x128xbf16>
    %cst = arith.constant dense<0.000000e+00> : vector<8x128xf32>
    %2 = tpu.matmul %0, %1, %cst {dimension_numbers = #tpu.dot_dimension_numbers<[1], [0], [0], [1], [0, 0, 1, 1], [], []>} : vector<8x128xbf16>, vector<128x128xbf16>, vector<8x128xf32> -> vector<8x128xf32>
    %c0_3 = arith.constant 0 : index
    %c0_4 = arith.constant 0 : index
    %3 = vector.load %arg4[%c0_3, %c0_4] : memref<1x128xf32, #tpu.memory_space<vmem>>, vector<1x128xf32>
    %4 = vector.broadcast %3 : vector<1x128xf32> to vector<8x128xf32>
    %5 = arith.addf %2, %4 : vector<8x128xf32>
    %c0_5 = arith.constant 0 : index
    %c0_6 = arith.constant 0 : index
    %6 = vector.load %arg6[%c0_5, %c0_6] : memref<8x128xf32, #tpu.memory_space<vmem>>, vector<8x128xf32>
    tpu.vector_store %arg6[%c0_5, %c0_6], %5 {strides = array<i32>} : memref<8x128xf32, #tpu.memory_space<vmem>>, vector<8x128xf32>,
    %c0_7 = arith.constant 0 : index
    %c0_8 = arith.constant 0 : index
    %7 = vector.load %arg5[%c0_7, %c0_8] : memref<8x128xbf16, #tpu.memory_space<vmem>>, vector<8x128xbf16>
    %8 = arith.extf %7 : vector<8x128xbf16> to vector<8x128xf32>
    %cst_9 = arith.constant 0.000000e+00 : f32
    %9 = vector.broadcast %cst_9 : f32 to vector<8x128xf32>
    %10 = arith.subf %9, %5 : vector<8x128xf32>
    %cst_10 = arith.constant 0.000000e+00 : f32
    %11 = vector.broadcast %cst_10 : f32 to vector<8x128xf32>
    %12 = arith.maximumf %10, %11 : vector<8x128xf32>
    %13 = vector.broadcast %cst_10 : f32 to vector<8x128xf32>
    %14 = arith.subf %10, %13 : vector<8x128xf32>
    %15 = arith.cmpf one, %14, %14 : vector<8x128xf32>
    %16 = vector.broadcast %cst_10 : f32 to vector<8x128xf32>
    %17 = arith.addf %10, %16 : vector<8x128xf32>
    %18 = math.absf %14 : vector<8x128xf32>
    %cst_11 = arith.constant 0.000000e+00 : f32
    %19 = vector.broadcast %cst_11 : f32 to vector<8x128xf32>
    %20 = arith.subf %19, %18 : vector<8x128xf32>
    %21 = math.exp %20 : vector<8x128xf32>
    %22 = math.log1p %21 : vector<8x128xf32>
    %23 = arith.addf %12, %22 : vector<8x128xf32>
    %24 = arith.select %15, %17, %23 : vector<8x128xi1>, vector<8x128xf32>
    %cst_12 = arith.constant 0.000000e+00 : f32
    %25 = vector.broadcast %cst_12 : f32 to vector<8x128xf32>
    %26 = arith.subf %25, %24 : vector<8x128xf32>
    %cst_13 = arith.constant 1.000000e+00 : f32
    %27 = vector.broadcast %cst_13 : f32 to vector<8x128xf32>
    %28 = arith.subf %27, %8 : vector<8x128xf32>
    %29 = arith.mulf %28, %5 : vector<8x128xf32>
    %30 = arith.subf %26, %29 : vector<8x128xf32>
    %c8_i32 = arith.constant 8 : i32
    %31 = arith.muli %arg0, %c8_i32 : i32
    %32 = tpu.iota {dimensions = array<i32: 0>} : vector<8x128xi32>
    %33 = vector.broadcast %31 : i32 to vector<8x128xi32>
    %34 = arith.addi %33, %32 : vector<8x128xi32>
    %c128_i32 = arith.constant 128 : i32
    %35 = arith.muli %arg1, %c128_i32 : i32
    %36 = tpu.iota {dimensions = array<i32: 1>} : vector<8x128xi32>
    %37 = vector.broadcast %35 : i32 to vector<8x128xi32>
    %38 = arith.addi %37, %36 : vector<8x128xi32>
    %c8_i32_14 = arith.constant 8 : i32
    %39 = vector.broadcast %c8_i32_14 : i32 to vector<8x128xi32>
    %40 = arith.cmpi slt, %34, %39 : vector<8x128xi32>
    %c64_i32 = arith.constant 64 : i32
    %41 = vector.broadcast %c64_i32 : i32 to vector<8x128xi32>
    %42 = arith.cmpi slt, %38, %41 : vector<8x128xi32>
    %43 = arith.andi %40, %42 : vector<8x128xi1>
    %cst_15 = arith.constant 0.000000e+00 : f32
    %44 = vector.broadcast %cst_15 : f32 to vector<8x128xf32>
    %45 = arith.select %43, %30, %44 : vector<8x128xi1>, vector<8x128xf32>
    %46 = vector.shape_cast %45 : vector<8x128xf32> to vector<1x8x128xf32>
    %cst_16 = arith.constant dense<0.000000e+00> : vector<1xf32>
    %47 = vector.multi_reduction <add>, %46, %cst_16 [1, 2] : vector<1x8x128xf32> to vector<1xf32>
    %48 = vector.shape_cast %47 : vector<1xf32> to vector<1x1x1xf32>
    %49 = vector.extract %48[0, 0, 0] : f32 from vector<1x1x1xf32>
    %50 = tpu.iota {dimensions = array<i32: 0>} : vector<8x128xi32>
    %c0_i32 = arith.constant 0 : i32
    %51 = vector.broadcast %c0_i32 : i32 to vector<8x128xi32>
    %52 = arith.cmpi eq, %50, %51 : vector<8x128xi32>
    %53 = tpu.iota {dimensions = array<i32: 1>} : vector<8x128xi32>
    %c0_i32_17 = arith.constant 0 : i32
    %54 = vector.broadcast %c0_i32_17 : i32 to vector<8x128xi32>
    %55 = arith.cmpi eq, %53, %54 : vector<8x128xi32>
    %56 = arith.andi %52, %55 : vector<8x128xi1>
    %cst_18 = arith.constant 0.000000e+00 : f32
    %57 = vector.broadcast %49 : f32 to vector<8x128xf32>
    %58 = vector.broadcast %cst_18 : f32 to vector<8x128xf32>
    %59 = arith.select %56, %57, %58 : vector<8x128xi1>, vector<8x128xf32>
    %c0_19 = arith.constant 0 : index
    %c0_20 = arith.constant 0 : index
    %60 = vector.load %arg7[%c0_19, %c0_20] : memref<8x128xf32, #tpu.memory_space<vmem>>, vector<8x128xf32>
    tpu.vector_store %arg7[%c0_19, %c0_20], %59 {strides = array<i32>} : memref<8x128xf32, #tpu.memory_space<vmem>>, vector<8x128xf32>,
    return
  }
  func.func @transform_0(%arg0: i32, %arg1: i32) -> (i32, i32) {
    %c0_i32 = arith.constant 0 : i32
    %c0_i32_0 = arith.constant 0 : i32
    return %arg0, %c0_i32 : i32, i32
  }
  func.func @transform_1(%arg0: i32, %arg1: i32) -> (i32, i32) {
    %c0_i32 = arith.constant 0 : i32
    %c0_i32_0 = arith.constant 0 : i32
    return %c0_i32, %arg1 : i32, i32
  }
  func.func @transform_2(%arg0: i32, %arg1: i32) -> (i32, i32) {
    %c0_i32 = arith.constant 0 : i32
    %c0_i32_0 = arith.constant 0 : i32
    return %c0_i32, %arg1 : i32, i32
  }
  func.func @transform_3(%arg0: i32, %arg1: i32) -> (i32, i32) {
    %c0_i32 = arith.constant 0 : i32
    return %arg0, %arg1 : i32, i32
  }
  func.func @transform_4(%arg0: i32, %arg1: i32) -> (i32, i32) {
    %c0_i32 = arith.constant 0 : i32
    return %arg0, %arg1 : i32, i32
  }
  func.func @transform_5(%arg0: i32, %arg1: i32) -> (i32, i32) {
    %c0_i32 = arith.constant 0 : i32
    return %arg0, %arg1 : i32, i32
  }
}

</mosaic_0001>

<llo_original>
// kernel: tpu_custom_call.1
$region0: #{tpu_custom_call.1}
  #allocation0 [shape = 'u32[]', space=smem, size = 0x4, offset = 0x4, fixed_abs, tag = 'smem constant byte address 0x4 - core index']
  #allocation1 [shape = 'u32[144,128]{1,0:T(1,128)}', space=vmem, size = 0x12000, scoped, tag = 'internal scratch']
  %s0 = inlined_call_operand.hbm [shape: bf16[8,128], index: 0, kind: input, shape index: {}]
  %s1 = inlined_call_operand.hbm [shape: bf16[128,128], index: 1, kind: input, shape index: {}]
  %s2 = inlined_call_operand.vmem [shape: f32[1,128], index: 2, kind: input, shape index: {}]
  %s3 = inlined_call_operand.vmem [shape: bf16[8,128], index: 3, kind: input, shape index: {}]
  %s4 = inlined_call_operand.hbm [shape: f32[8,128], index: 4, kind: output, shape index: {0}]
  %s5 = inlined_call_operand.hbm [shape: f32[8,128], index: 5, kind: output, shape index: {1}]
  %6 = xla_tuple %s4, %s5
  %s7 = sld [smem:[#allocation0]]
  $region42: #{tpu_custom_call.1} parent=0
    _
  %s9 = ssub.s32 1, %s7
  %s10 = scalar_select 0, %s9, %s7
  $region1: #{tpu_custom_call.1} parent=0
    #allocation2 [shape = 'u8[2048]{0}', space=vmem, size = 0x800, scoped, tag = 'input window, operand 0, single buffered']
    #allocation3 [shape = 's32[1]{0}', space=sflag, size = 0x4, scoped, tag = 'scoped memory for tpu_custom_call.1']
    #allocation4 [shape = 's32[1]{0}', space=sflag, size = 0x4, scoped, tag = 'scoped memory for tpu_custom_call.1']
    #allocation5 [shape = 'u8[32768]{0}', space=vmem, size = 0x8000, scoped, tag = 'input window, operand 1, single buffered']
    #allocation6 [shape = 's32[1]{0}', space=sflag, size = 0x4, scoped, tag = 'scoped memory for tpu_custom_call.1']
    #allocation7 [shape = 'u8[4096]{0}', space=vmem, size = 0x1000, scoped, tag = 'output window, operand 0, single buffered']
    #allocation8 [shape = 'u8[4096]{0}', space=vmem, size = 0x1000, scoped, tag = 'output window, operand 1, single buffered']
    #allocation9 [shape = 's32[1]{0}', space=sflag, size = 0x4, scoped, tag = 'scoped memory for tpu_custom_call.1']
    %11 = vsyncpa [#allocation3], 0
    %12 = vsyncpa [#allocation6], 0
    %13 = vsyncpa [#allocation4], 0
    %14 = vsyncpa [#allocation9], 0
    // Predicated region
    $region2: #{tpu_custom_call.1} parent=1 // pred_check
      _
    $region3: #{tpu_custom_call.1} parent=1 // pred_check_branch
      %16 = sbr.rel (0) target = $region5
    $region4: #{tpu_custom_call.1} parent=1 // pred_region
      %s18 = ssub.s32 64, 64
      %19 = vsyncadd [#allocation3], %s18
      %s21 = sshll.u32 [#allocation2], 4
      %s22 = int_to_ptr.vmem [resolvable:$true] %s21
      %24 = dma.hbm_to_vmem [thread:$0]  %s0, 64, %s22, [#allocation3]
    $region5: #{tpu_custom_call.1} parent=1 // pred_fallthru
      _
    // Predicated region
    $region6: #{tpu_custom_call.1} parent=1 // pred_check
      _
    $region7: #{tpu_custom_call.1} parent=1 // pred_check_branch
      %26 = sbr.rel (0) target = $region9
    $region8: #{tpu_custom_call.1} parent=1 // pred_region
      %s28 = ssub.s32 1024, 1024
      %29 = vsyncadd [#allocation6], %s28
      %s30 = sshll.u32 [#allocation5], 4
      %s31 = int_to_ptr.vmem [resolvable:$true] %s30
      %36 = dma.hbm_to_vmem [thread:$0]  %s1, 1024, %s31, [#allocation6], 64, 64, 4
    $region9: #{tpu_custom_call.1} parent=1 // pred_fallthru
      _
    // Predicated region
    $region10: #{tpu_custom_call.1} parent=1 // pred_check
      _
    $region11: #{tpu_custom_call.1} parent=1 // pred_check_branch
      %38 = sbr.rel (0) target = $region13
    $region12: #{tpu_custom_call.1} parent=1 // pred_region
      _
    $region13: #{tpu_custom_call.1} parent=1 // pred_fallthru
      _
    // Predicated region
    $region14: #{tpu_custom_call.1} parent=1 // pred_check
      _
    $region15: #{tpu_custom_call.1} parent=1 // pred_check_branch
      %40 = sbr.rel (0) target = $region17
    $region16: #{tpu_custom_call.1} parent=1 // pred_region
      _
    $region17: #{tpu_custom_call.1} parent=1 // pred_fallthru
      _
    // Predicated region
    $region18: #{tpu_custom_call.1} parent=1 // pred_check
      _
    $region19: #{tpu_custom_call.1} parent=1 // pred_check_branch
      %42 = sbr.rel (0) target = $region21
    $region20: #{tpu_custom_call.1} parent=1 // pred_region
      %43 = dma.done [#allocation3], 64
    $region21: #{tpu_custom_call.1} parent=1 // pred_fallthru
      _
    // Predicated region
    $region22: #{tpu_custom_call.1} parent=1 // pred_check
      _
    $region23: #{tpu_custom_call.1} parent=1 // pred_check_branch
      %45 = sbr.rel (0) target = $region25
    $region24: #{tpu_custom_call.1} parent=1 // pred_region
      %46 = dma.done [#allocation6], 1024
    $region25: #{tpu_custom_call.1} parent=1 // pred_fallthru
      _
    %v48 = vld [vmem:[#allocation2] sm:$0xf]
    %v49 = vld [vmem:[#allocation5] sm:$0xf]
    %v50 = vld [vmem:[#allocation5 + $0x4] sm:$0xf]
    %v51 = vld [vmem:[#allocation5 + $0x8] sm:$0xf]
    %v52 = vld [vmem:[#allocation5 + $0xc] sm:$0xf]
    %v53 = vld [vmem:[#allocation5 + $0x10] sm:$0xf]
    %v54 = vld [vmem:[#allocation5 + $0x14] sm:$0xf]
    %v55 = vld [vmem:[#allocation5 + $0x18] sm:$0xf]
    %v56 = vld [vmem:[#allocation5 + $0x1c] sm:$0xf]
    %v57 = vld [vmem:[#allocation5 + $0x20] sm:$0xf]
    %v58 = vld [vmem:[#allocation5 + $0x24] sm:$0xf]
    %v59 = vld [vmem:[#allocation5 + $0x28] sm:$0xf]
    %v60 = vld [vmem:[#allocation5 + $0x2c] sm:$0xf]
    %v61 = vld [vmem:[#allocation5 + $0x30] sm:$0xf]
    %v62 = vld [vmem:[#allocation5 + $0x34] sm:$0xf]
    %v63 = vld [vmem:[#allocation5 + $0x38] sm:$0xf]
    %v64 = vld [vmem:[#allocation5 + $0x3c] sm:$0xf]
    %v65 = vld [vmem:[%s2] sm:$0x1]
    %v67 = vlaneseq
    %v68 = vshrl.u32 %v67, 7
    %v69 = vsub.s32 0, %v68
    %v70 = vrot.slane %v65, %v69
    %v88 = vunpack.c.l.b16 %v49
    %v89 = vunpack.c.l.b16 %v50
    %v90 = vunpack.c.l.b16 %v51
    %v91 = vunpack.c.l.b16 %v52
    %v92 = vunpack.c.l.b16 %v53
    %v93 = vunpack.c.l.b16 %v54
    %v94 = vunpack.c.l.b16 %v55
    %v95 = vunpack.c.l.b16 %v56
    %v96 = vunpack.c.l.b16 %v57
    %v97 = vunpack.c.l.b16 %v58
    %v98 = vunpack.c.l.b16 %v59
    %v99 = vunpack.c.l.b16 %v60
    %v100 = vunpack.c.l.b16 %v61
    %v101 = vunpack.c.l.b16 %v62
    %v102 = vunpack.c.l.b16 %v63
    %v103 = vunpack.c.l.b16 %v64
    %v104 = vpack.c.b16 %v89, %v88
    %v105 = vpack.c.b16 %v91, %v90
    %v106 = vpack.c.b16 %v93, %v92
    %v107 = vpack.c.b16 %v95, %v94
    %v108 = vpack.c.b16 %v97, %v96
    %v109 = vpack.c.b16 %v99, %v98
    %v110 = vpack.c.b16 %v101, %v100
    %v111 = vpack.c.b16 %v103, %v102
    %120 = vmatprep.subr.bf16.mxu0 0
    %121 = vmatpush1.bf16.msra.mxu0 %v111
    %122 = vmatprep.subr.bf16.mxu0 0
    %123 = vmatpush1.bf16.msra.mxu0 %v110
    %124 = vmatprep.subr.bf16.mxu0 0
    %125 = vmatpush1.bf16.msra.mxu0 %v109
    %126 = vmatprep.subr.bf16.mxu0 0
    %127 = vmatpush1.bf16.msra.mxu0 %v108
    %128 = vmatprep.subr.bf16.mxu0 0
    %129 = vmatpush1.bf16.msra.mxu0 %v107
    %130 = vmatprep.subr.bf16.mxu0 0
    %131 = vmatpush1.bf16.msra.mxu0 %v106
    %132 = vmatprep.subr.bf16.mxu0 0
    %133 = vmatpush1.bf16.msra.mxu0 %v105
    %134 = vmatprep.subr.bf16.mxu0 0
    %135 = vmatpush1.bf16.msra.mxu0 %v104
    %136 = vmatprep.subr.bf16.mxu0 0
    %137 = vmatpush2.bf16.msra.mxu0 0
    %138 = vmatprep.subr.bf16.mxu0 0
    %139 = vmatpush2.bf16.msra.mxu0 0
    %140 = vmatprep.subr.bf16.mxu0 0
    %141 = vmatpush2.bf16.msra.mxu0 0
    %142 = vmatprep.subr.bf16.mxu0 0
    %143 = vmatpush2.bf16.msra.mxu0 0
    %144 = vmatprep.subr.bf16.mxu0 0
    %145 = vmatpush2.bf16.msra.mxu0 0
    %146 = vmatprep.subr.bf16.mxu0 0
    %147 = vmatpush2.bf16.msra.mxu0 0
    %148 = vmatprep.subr.bf16.mxu0 0
    %149 = vmatpush2.bf16.msra.mxu0 0
    %150 = vmatprep.subr.bf16.mxu0 0
    %151 = vmatpush2.bf16.msra.mxu0 0
    %152 = vmatprep.mubr.bf16.mxu0 0
    %153 = vmatmul.mubr.bf16.gmra.mxu0 %v48
    %v154 = vpop.f32.mrf.mxu0
    %v155 = vadd.f32 %v70, %v154
    %v156 = vpop.f32.mrf.mxu0
    %v157 = vpop.f32.mrf.mxu0
    %v158 = vpop.f32.mrf.mxu0
    %159 = vdwg.mxu0
    %160 = vst [vmem:[#allocation7] sm:$0xff] %v155
    %v161 = vld [vmem:[%s3] sm:$0xf]
    %v162 = vunpack.c.l.bf16 %v161
    %v163 = vsub.f32 0.0, %v155
    %v164 = vmax.f32 %v163, 0.0
    %vm165 = vcmp.ne.f32.partialorder %v163, %v163
    %v166 = vadd.f32 %v163, 0.0
    %v167 = vand.u32 2147483647, %v163
    %v168 = vsub.f32 0.0, %v167
    %v169 = vmul.f32 %v168, 1.442695
    %v170 = vpow.pop %v169
    %v171 = vadd.f32 %v170, 1.0
    %v172 = vlog2.pop %v171
    %v173 = vmul.f32 %v172, 0.6931472
    %v174 = vmul.f32 -0.5, %v170
    %v175 = vadd.f32 %v174, 1.0
    %v176 = vmul.f32 %v175, %v170
    %v177 = vand.u32 2147483647, %v170
    %vm178 = vcmp.lt.f32.partialorder %v177, 0.0004427343
    %v179 = vsel %vm178, %v176, %v173
    %v180 = vadd.f32 %v164, %v179
    %v181 = vsel %vm165, %v166, %v180
    %v182 = vsub.f32 0.0, %v181
    %v183 = vsub.f32 1.0, %v162
    %v184 = vmul.f32 %v183, %v155
    %v185 = vsub.f32 %v182, %v184
    %s186 = smul.u32 0, 8
    %v187 = vlaneseq
    %v188 = vshrl.u32 %v187, 7
    %v189 = vstv %s186
    %v190 = vadd.s32 %v189, %v188
    %s191 = smul.u32 0, 128
    %v192 = vlaneseq
    %v193 = vand.u32 %v192, 127
    %v194 = vstv %s191
    %v195 = vadd.s32 %v194, %v193
    %vm196 = vcmp.lt.s32.totalorder %v190, 8
    %vm197 = vcmp.lt.s32.totalorder %v195, 64
    %vm198 = vmand %vm196, %vm197
    %v199 = vsel %vm198, %v185, 0.0
    %200 = vadd.xlane.f32.xlu0 %v199
    %v201 = vpop.xlane.xlu0 %200
    %v202 = vrot.slane %v201, 4
    %v203 = vadd.f32 %v201, %v202
    %v204 = vrot.slane %v203, 2
    %v205 = vadd.f32 %v203, %v204
    %v206 = vrot.slane %v205, 1
    %v207 = vadd.f32 %v205, %v206
    %s208 = vtos %v207
    %vm209 = vcmp.eq.s32.totalorder %v188, 0
    %vm210 = vcmp.eq.s32.totalorder %v193, 0
    %vm211 = vmand %vm209, %vm210
    %v212 = vstv %s208
    %v213 = vsel %vm211, %v212, 0.0
    %214 = vst [vmem:[#allocation8] sm:$0xff] %v213
    // Predicated region
    $region26: #{tpu_custom_call.1} parent=1 // pred_check
      _
    $region27: #{tpu_custom_call.1} parent=1 // pred_check_branch
      %216 = sbr.rel (0) target = $region29
    $region28: #{tpu_custom_call.1} parent=1 // pred_region
      %s218 = ssub.s32 128, 128
      %219 = vsyncadd [#allocation4], %s218
      %s221 = sshll.u32 [#allocation7], 4
      %s222 = int_to_ptr.vmem [resolvable:$true] %s221
      %224 = dma.vmem_to_hbm [thread:$0]  %s222, 128, %s4, [#allocation4]
    $region29: #{tpu_custom_call.1} parent=1 // pred_fallthru
      _
    // Predicated region
    $region30: #{tpu_custom_call.1} parent=1 // pred_check
      _
    $region31: #{tpu_custom_call.1} parent=1 // pred_check_branch
      %226 = sbr.rel (0) target = $region33
    $region32: #{tpu_custom_call.1} parent=1 // pred_region
      %s228 = ssub.s32 128, 128
      %229 = vsyncadd [#allocation9], %s228
      %s231 = sshll.u32 [#allocation8], 4
      %s232 = int_to_ptr.vmem [resolvable:$true] %s231
      %234 = dma.vmem_to_hbm [thread:$0]  %s232, 128, %s5, [#allocation9]
    $region33: #{tpu_custom_call.1} parent=1 // pred_fallthru
      _
    // Predicated region
    $region34: #{tpu_custom_call.1} parent=1 // pred_check
      _
    $region35: #{tpu_custom_call.1} parent=1 // pred_check_branch
      %236 = sbr.rel (0) target = $region37
    $region36: #{tpu_custom_call.1} parent=1 // pred_region
      %237 = dma.done [#allocation4], 128
    $region37: #{tpu_custom_call.1} parent=1 // pred_fallthru
      _
    // Predicated region
    $region38: #{tpu_custom_call.1} parent=1 // pred_check
      _
    $region39: #{tpu_custom_call.1} parent=1 // pred_check_branch
      %239 = sbr.rel (0) target = $region41
    $region40: #{tpu_custom_call.1} parent=1 // pred_region
      %240 = dma.done [#allocation9], 128
    $region41: #{tpu_custom_call.1} parent=1 // pred_fallthru
      _
    %241 = vsyncpa [#allocation3], 1
    %242 = vsyncpa [#allocation6], 1
    %243 = vsyncpa [#allocation4], 1
    %244 = vsyncpa [#allocation9], 1

</llo_original>
